<compile_context>
chip_gen: v7x
topology: tpu7x:2x2x1
jax: 0.10.0
libtpu: 0.0.40
codegen_flags: <defaults>
</compile_context>

<pallas_src>
import functools

import jax
import jax.numpy as jnp
import numpy as np
from jax import lax
from jax.experimental import pallas as pl
from jax.experimental.pallas import tpu as pltpu


def _choose_row_tile(batch_size: int) -> int:
    """Largest row tile (<=256, multiple of 8) that divides the batch."""
    if batch_size <= 256:
        return batch_size
    for tr in (256, 128, 64, 32, 16, 8):
        if batch_size % tr == 0:
            return tr
    # TODO(synk): ragged batch sizes fall back to a single (untiled) row block.
    return batch_size


def _hard_negative_kernel(o1_ref, o2_ref, sum_ref, *, batch_size, row_tile,
                          tau_plus, beta, temperature, estimator):
    B = batch_size
    TR = row_tile
    inv_t = 1.0 / temperature
    N = 2 * B - 2

    # Resident operands (same block every grid step -> DMA'd once).
    o1 = o1_ref[...].astype(jnp.float32)                       # (B, D)
    o2 = o2_ref[...].astype(jnp.float32)                       # (B, D)

    # Query row block for this grid step (slice of the resident operands).
    start = pl.multiple_of(pl.program_id(0) * TR, TR)
    q1 = o1_ref[pl.ds(start, TR), :].astype(jnp.float32)       # (TR, D)
    q2 = o2_ref[pl.ds(start, TR), :].astype(jnp.float32)       # (TR, D)

    # Excluded-term logits (tiny (TR,1) vectors): these are exactly what the
    # boolean mask used to remove (self column and positive-pair column).
    pos_logit = jnp.sum(q1 * q2, axis=-1, keepdims=True) * inv_t   # (TR, 1)
    self1_logit = jnp.sum(q1 * q1, axis=-1, keepdims=True) * inv_t
    self2_logit = jnp.sum(q2 * q2, axis=-1, keepdims=True) * inv_t
    pos = jnp.exp(pos_logit)
    if estimator == 'hard' and beta != 1.0:
        pos_b = jnp.exp(beta * pos_logit)                      # pos ** beta
    else:
        pos_b = pos

    dn = (((1,), (1,)), ((), ()))   # contract feature dims; no transpose copy.

    def row_stats(q):
        """Full-row sums of exp(sim), exp(beta*sim), exp((1+beta)*sim)."""
        sim_a = lax.dot_general(q, o1, dn,
                                preferred_element_type=jnp.float32) * inv_t
        sim_b = lax.dot_general(q, o2, dn,
                                preferred_element_type=jnp.float32) * inv_t
        e_a = jnp.exp(sim_a)
        e_b = jnp.exp(sim_b)
        s_neg = (jnp.sum(e_a, axis=-1, keepdims=True)
                 + jnp.sum(e_b, axis=-1, keepdims=True))       # (TR, 1)
        if estimator != 'hard':
            return s_neg, None, None
        if beta == 1.0:
            # imp == neg and imp*neg == neg^2: no extra exponentials needed.
            s_imp = s_neg
            s_impneg = (jnp.sum(e_a * e_a, axis=-1, keepdims=True)
                        + jnp.sum(e_b * e_b, axis=-1, keepdims=True))
        else:
            eb_a = jnp.exp(beta * sim_a)
            eb_b = jnp.exp(beta * sim_b)
            s_imp = (jnp.sum(eb_a, axis=-1, keepdims=True)
                     + jnp.sum(eb_b, axis=-1, keepdims=True))
            s_impneg = (jnp.sum(e_a * eb_a, axis=-1, keepdims=True)
                        + jnp.sum(e_b * eb_b, axis=-1, keepdims=True))
        return s_neg, s_imp, s_impneg

    def half_loss(stats, self_logit):
        s_neg, s_imp, s_impneg = stats
        d = jnp.exp(self_logit)                                # excluded self term
        if estimator == 'hard':
            d_b = d if beta == 1.0 else jnp.exp(beta * self_logit)
            sum_imp = s_imp - d_b - pos_b                      # masked sum of imp
            sum_impneg = s_impneg - d * d_b - pos * pos_b      # masked sum of imp*neg
            reweight = (float(N) * sum_impneg) / sum_imp       # / (imp.mean())
            ng = (-tau_plus * N * pos + reweight) / (1.0 - tau_plus)
            ng = jnp.maximum(ng, N * np.e ** (-1.0 / temperature))
        else:  # 'easy'
            ng = s_neg - d - pos
        # -log(pos / (pos + ng))
        return jnp.log((pos + ng) / pos)

    l1 = half_loss(row_stats(q1), self1_logit)                 # rows of out_1
    l2 = half_loss(row_stats(q2), self2_logit)                 # rows of out_2
    sum_ref[0, 0] = jnp.sum(l1) + jnp.sum(l2)


def hard_negative_loss(out_1, out_2, *, tau_plus, beta, temperature,
                       estimator='hard'):
    """Pallas implementation of HardNegative.forward (attr_uni=None)."""
    if estimator not in ('hard', 'easy'):
        raise ValueError(
            'Invalid estimator selected. Please use any of [hard, easy]')
    assert out_1.shape == out_2.shape and out_1.ndim == 2
    B, D = out_1.shape
    TR = _choose_row_tile(B)
    num_blocks = B // TR

    kernel = functools.partial(
        _hard_negative_kernel,
        batch_size=B, row_tile=TR,
        tau_plus=float(tau_plus), beta=float(beta),
        temperature=float(temperature), estimator=estimator)

    n_exp = (2 * B) * (2 * B)
    if estimator == 'hard' and float(beta) != 1.0:
        n_exp *= 2
    cost = pl.CostEstimate(
        flops=int(8 * B * B * D),                  # 4 (TR,D)x(D,B) matmuls/step
        transcendentals=int(n_exp),
        bytes_accessed=int(2 * B * D * jnp.dtype(out_1.dtype).itemsize
                           + 4 * num_blocks))

    # Rough VMEM need: two resident (B,D) f32 operands + a handful of (TR,B)
    # f32 exp/sim temporaries.  Raise the scoped limit above the 32 MiB
    # default only when needed, keeping headroom for v7x's 64 MiB VMEM.
    est_bytes = 4 * (2 * B * D + 8 * TR * B + 4 * TR * D)
    compiler_kwargs = dict(dimension_semantics=("parallel",))
    if est_bytes > 28 * 1024 * 1024:
        compiler_kwargs["vmem_limit_bytes"] = int(min(2 * est_bytes,
                                                      60 * 1024 * 1024))

    partial = pl.pallas_call(
        kernel,
        out_shape=jax.ShapeDtypeStruct((num_blocks, 1), jnp.float32),
        grid=(num_blocks,),
        in_specs=[pl.BlockSpec((B, D), lambda r: (0, 0)),
                  pl.BlockSpec((B, D), lambda r: (0, 0))],
        out_specs=pl.BlockSpec((1, 1), lambda r: (r, 0),
                               memory_space=pltpu.MemorySpace.SMEM),
        compiler_params=pltpu.CompilerParams(**compiler_kwargs),
        cost_estimate=cost,
    )(out_1, out_2)
    # Tiny glue: final mean over all 2B rows.
    return jnp.sum(partial) / (2 * B)


def _reference_loss(out_1, out_2, *, tau_plus, beta, temperature, estimator):
    """Pure-JAX reference mirroring the PyTorch forward (for validation)."""
    B, _ = out_1.shape
    out = jnp.concatenate([out_1, out_2], axis=0)
    neg = jnp.exp(out @ out.T / temperature)
    row = jnp.arange(2 * B)[:, None] % B
    col = jnp.arange(2 * B)[None, :]
    keep = (col != row) & (col != row + B)
    pos = jnp.exp(jnp.sum(out_1 * out_2, axis=-1) / temperature)
    pos = jnp.concatenate([pos, pos], axis=0)
    N = 2 * B - 2
    if estimator == 'hard':
        imp = jnp.where(keep, jnp.exp(beta * jnp.log(neg)), 0.0)
        neg_m = jnp.where(keep, neg, 0.0)
        reweight = jnp.sum(imp * neg_m, -1) / (jnp.sum(imp, -1) / N)
        ng = (-tau_plus * N * pos + reweight) / (1 - tau_plus)
        ng = jnp.maximum(ng, N * np.e ** (-1 / temperature))
    else:
        ng = jnp.sum(jnp.where(keep, neg, 0.0), -1)
    return jnp.mean(-jnp.log(pos / (pos + ng)))


if __name__ == "__main__":
    # Small, deterministic example: batch=8, hidden=32.
    key = jax.random.PRNGKey(0)
    k1, k2 = jax.random.split(key)
    B, D = 8, 32
    out_1 = jax.random.normal(k1, (B, D), dtype=jnp.float32)
    out_2 = jax.random.normal(k2, (B, D), dtype=jnp.float32)
    # As in typical contrastive usage, embeddings are L2-normalized by the caller.
    out_1 = out_1 / jnp.linalg.norm(out_1, axis=-1, keepdims=True)
    out_2 = out_2 / jnp.linalg.norm(out_2, axis=-1, keepdims=True)

    cases = [
        dict(tau_plus=0.1, beta=1.0, temperature=0.5, estimator='hard'),
        dict(tau_plus=0.1, beta=0.5, temperature=0.5, estimator='hard'),
        dict(tau_plus=0.1, beta=1.0, temperature=0.5, estimator='easy'),
    ]
    for params in cases:
        loss = hard_negative_loss(out_1, out_2, **params)
        jax.block_until_ready(loss)
        ref = _reference_loss(out_1, out_2, **params)
        assert np.allclose(np.asarray(loss), np.asarray(ref),
                           rtol=1e-4, atol=1e-5), \
            f"mismatch for {params}: pallas={loss} ref={ref}"

    print("KERNEL_OK")
</pallas_src>

<mosaic_0001>
module attributes {stable_mosaic.version = 11 : i64} {
  func.func @_hard_negative_kernel(%arg0: i32, %arg1: memref<8x32xf32, #tpu.memory_space<vmem>>, %arg2: memref<8x32xf32, #tpu.memory_space<vmem>>, %arg3: memref<1x1xf32, #tpu.memory_space<smem>>) attributes {dimension_semantics = [#tpu.dimension_semantics<parallel>], iteration_bounds = array<i64: 1>, scalar_prefetch = 0 : i64, scratch_operands = 0 : i64, tpu.core_type = #tpu.core_type<tc>, window_params = [{pipeline_mode = #tpu.pipeline_mode<synchronous>, transform_indices = @transform_0, window_bounds = array<i64: 8, 32>}, {pipeline_mode = #tpu.pipeline_mode<synchronous>, transform_indices = @transform_1, window_bounds = array<i64: 8, 32>}, {transform_indices = @transform_2, window_bounds = array<i64: 1, 1>}]} {
    %c0 = arith.constant 0 : index
    %c0_0 = arith.constant 0 : index
    %0 = vector.load %arg1[%c0, %c0_0] : memref<8x32xf32, #tpu.memory_space<vmem>>, vector<8x32xf32>
    %c0_1 = arith.constant 0 : index
    %c0_2 = arith.constant 0 : index
    %1 = vector.load %arg2[%c0_1, %c0_2] : memref<8x32xf32, #tpu.memory_space<vmem>>, vector<8x32xf32>
    %c8_i32 = arith.constant 8 : i32
    %2 = arith.muli %arg0, %c8_i32 : i32
    %3 = tpu.assume_multiple %2, 8 : i32
    %4 = arith.index_cast %3 : i32 to index
    %c0_3 = arith.constant 0 : index
    %5 = vector.load %arg1[%4, %c0_3] : memref<8x32xf32, #tpu.memory_space<vmem>>, vector<8x32xf32>
    %6 = arith.index_cast %3 : i32 to index
    %c0_4 = arith.constant 0 : index
    %7 = vector.load %arg2[%6, %c0_4] : memref<8x32xf32, #tpu.memory_space<vmem>>, vector<8x32xf32>
    %8 = arith.mulf %5, %7 : vector<8x32xf32>
    %cst = arith.constant dense<0.000000e+00> : vector<8xf32>
    %9 = vector.multi_reduction <add>, %8, %cst [1] : vector<8x32xf32> to vector<8xf32>
    %10 = vector.shape_cast %9 : vector<8xf32> to vector<8x1xf32>
    %cst_5 = arith.constant 2.000000e+00 : f32
    %11 = vector.broadcast %cst_5 : f32 to vector<8x1xf32>
    %12 = arith.mulf %10, %11 : vector<8x1xf32>
    %13 = arith.mulf %5, %5 : vector<8x32xf32>
    %cst_6 = arith.constant dense<0.000000e+00> : vector<8xf32>
    %14 = vector.multi_reduction <add>, %13, %cst_6 [1] : vector<8x32xf32> to vector<8xf32>
    %15 = vector.shape_cast %14 : vector<8xf32> to vector<8x1xf32>
    %cst_7 = arith.constant 2.000000e+00 : f32
    %16 = vector.broadcast %cst_7 : f32 to vector<8x1xf32>
    %17 = arith.mulf %15, %16 : vector<8x1xf32>
    %18 = arith.mulf %7, %7 : vector<8x32xf32>
    %cst_8 = arith.constant dense<0.000000e+00> : vector<8xf32>
    %19 = vector.multi_reduction <add>, %18, %cst_8 [1] : vector<8x32xf32> to vector<8xf32>
    %20 = vector.shape_cast %19 : vector<8xf32> to vector<8x1xf32>
    %cst_9 = arith.constant 2.000000e+00 : f32
    %21 = vector.broadcast %cst_9 : f32 to vector<8x1xf32>
    %22 = arith.mulf %20, %21 : vector<8x1xf32>
    %23 = math.exp %12 : vector<8x1xf32>
    %cst_10 = arith.constant dense<0.000000e+00> : vector<8x8xf32>
    %24 = tpu.matmul %5, %0, %cst_10 {dimension_numbers = #tpu.dot_dimension_numbers<[1], [1], [0], [0], [0, 0, 1, 0], [], []>} : vector<8x32xf32>, vector<8x32xf32>, vector<8x8xf32> -> vector<8x8xf32>
    %cst_11 = arith.constant 2.000000e+00 : f32
    %25 = vector.broadcast %cst_11 : f32 to vector<8x8xf32>
    %26 = arith.mulf %24, %25 : vector<8x8xf32>
    %cst_12 = arith.constant dense<0.000000e+00> : vector<8x8xf32>
    %27 = tpu.matmul %5, %1, %cst_12 {dimension_numbers = #tpu.dot_dimension_numbers<[1], [1], [0], [0], [0, 0, 1, 0], [], []>} : vector<8x32xf32>, vector<8x32xf32>, vector<8x8xf32> -> vector<8x8xf32>
    %cst_13 = arith.constant 2.000000e+00 : f32
    %28 = vector.broadcast %cst_13 : f32 to vector<8x8xf32>
    %29 = arith.mulf %27, %28 : vector<8x8xf32>
    %30 = math.exp %26 : vector<8x8xf32>
    %31 = math.exp %29 : vector<8x8xf32>
    %cst_14 = arith.constant dense<0.000000e+00> : vector<8xf32>
    %32 = vector.multi_reduction <add>, %30, %cst_14 [1] : vector<8x8xf32> to vector<8xf32>
    %33 = vector.shape_cast %32 : vector<8xf32> to vector<8x1xf32>
    %cst_15 = arith.constant dense<0.000000e+00> : vector<8xf32>
    %34 = vector.multi_reduction <add>, %31, %cst_15 [1] : vector<8x8xf32> to vector<8xf32>
    %35 = vector.shape_cast %34 : vector<8xf32> to vector<8x1xf32>
    %36 = arith.addf %33, %35 : vector<8x1xf32>
    %37 = arith.mulf %30, %30 : vector<8x8xf32>
    %cst_16 = arith.constant dense<0.000000e+00> : vector<8xf32>
    %38 = vector.multi_reduction <add>, %37, %cst_16 [1] : vector<8x8xf32> to vector<8xf32>
    %39 = vector.shape_cast %38 : vector<8xf32> to vector<8x1xf32>
    %40 = arith.mulf %31, %31 : vector<8x8xf32>
    %cst_17 = arith.constant dense<0.000000e+00> : vector<8xf32>
    %41 = vector.multi_reduction <add>, %40, %cst_17 [1] : vector<8x8xf32> to vector<8xf32>
    %42 = vector.shape_cast %41 : vector<8xf32> to vector<8x1xf32>
    %43 = arith.addf %39, %42 : vector<8x1xf32>
    %44 = math.exp %17 : vector<8x1xf32>
    %45 = arith.subf %36, %44 : vector<8x1xf32>
    %46 = arith.subf %45, %23 : vector<8x1xf32>
    %47 = arith.mulf %44, %44 : vector<8x1xf32>
    %48 = arith.subf %43, %47 : vector<8x1xf32>
    %49 = arith.mulf %23, %23 : vector<8x1xf32>
    %50 = arith.subf %48, %49 : vector<8x1xf32>
    %cst_18 = arith.constant 1.400000e+01 : f32
    %51 = vector.broadcast %cst_18 : f32 to vector<8x1xf32>
    %52 = arith.mulf %51, %50 : vector<8x1xf32>
    %53 = arith.divf %52, %46 : vector<8x1xf32>
    %cst_19 = arith.constant -1.400000e+00 : f32
    %54 = vector.broadcast %cst_19 : f32 to vector<8x1xf32>
    %55 = arith.mulf %54, %23 : vector<8x1xf32>
    %56 = arith.addf %55, %53 : vector<8x1xf32>
    %cst_20 = arith.constant 0.899999976 : f32
    %57 = vector.broadcast %cst_20 : f32 to vector<8x1xf32>
    %58 = arith.divf %56, %57 : vector<8x1xf32>
    %cst_21 = arith.constant 1.89469397 : f32
    %59 = vector.broadcast %cst_21 : f32 to vector<8x1xf32>
    %60 = arith.maximumf %58, %59 : vector<8x1xf32>
    %61 = arith.addf %23, %60 : vector<8x1xf32>
    %62 = arith.divf %61, %23 : vector<8x1xf32>
    %63 = math.log %62 : vector<8x1xf32>
    %cst_22 = arith.constant dense<0.000000e+00> : vector<8x8xf32>
    %64 = tpu.matmul %7, %0, %cst_22 {dimension_numbers = #tpu.dot_dimension_numbers<[1], [1], [0], [0], [0, 0, 1, 0], [], []>} : vector<8x32xf32>, vector<8x32xf32>, vector<8x8xf32> -> vector<8x8xf32>
    %cst_23 = arith.constant 2.000000e+00 : f32
    %65 = vector.broadcast %cst_23 : f32 to vector<8x8xf32>
    %66 = arith.mulf %64, %65 : vector<8x8xf32>
    %cst_24 = arith.constant dense<0.000000e+00> : vector<8x8xf32>
    %67 = tpu.matmul %7, %1, %cst_24 {dimension_numbers = #tpu.dot_dimension_numbers<[1], [1], [0], [0], [0, 0, 1, 0], [], []>} : vector<8x32xf32>, vector<8x32xf32>, vector<8x8xf32> -> vector<8x8xf32>
    %cst_25 = arith.constant 2.000000e+00 : f32
    %68 = vector.broadcast %cst_25 : f32 to vector<8x8xf32>
    %69 = arith.mulf %67, %68 : vector<8x8xf32>
    %70 = math.exp %66 : vector<8x8xf32>
    %71 = math.exp %69 : vector<8x8xf32>
    %cst_26 = arith.constant dense<0.000000e+00> : vector<8xf32>
    %72 = vector.multi_reduction <add>, %70, %cst_26 [1] : vector<8x8xf32> to vector<8xf32>
    %73 = vector.shape_cast %72 : vector<8xf32> to vector<8x1xf32>
    %cst_27 = arith.constant dense<0.000000e+00> : vector<8xf32>
    %74 = vector.multi_reduction <add>, %71, %cst_27 [1] : vector<8x8xf32> to vector<8xf32>
    %75 = vector.shape_cast %74 : vector<8xf32> to vector<8x1xf32>
    %76 = arith.addf %73, %75 : vector<8x1xf32>
    %77 = arith.mulf %70, %70 : vector<8x8xf32>
    %cst_28 = arith.constant dense<0.000000e+00> : vector<8xf32>
    %78 = vector.multi_reduction <add>, %77, %cst_28 [1] : vector<8x8xf32> to vector<8xf32>
    %79 = vector.shape_cast %78 : vector<8xf32> to vector<8x1xf32>
    %80 = arith.mulf %71, %71 : vector<8x8xf32>
    %cst_29 = arith.constant dense<0.000000e+00> : vector<8xf32>
    %81 = vector.multi_reduction <add>, %80, %cst_29 [1] : vector<8x8xf32> to vector<8xf32>
    %82 = vector.shape_cast %81 : vector<8xf32> to vector<8x1xf32>
    %83 = arith.addf %79, %82 : vector<8x1xf32>
    %84 = math.exp %22 : vector<8x1xf32>
    %85 = arith.subf %76, %84 : vector<8x1xf32>
    %86 = arith.subf %85, %23 : vector<8x1xf32>
    %87 = arith.mulf %84, %84 : vector<8x1xf32>
    %88 = arith.subf %83, %87 : vector<8x1xf32>
    %89 = arith.mulf %23, %23 : vector<8x1xf32>
    %90 = arith.subf %88, %89 : vector<8x1xf32>
    %cst_30 = arith.constant 1.400000e+01 : f32
    %91 = vector.broadcast %cst_30 : f32 to vector<8x1xf32>
    %92 = arith.mulf %91, %90 : vector<8x1xf32>
    %93 = arith.divf %92, %86 : vector<8x1xf32>
    %cst_31 = arith.constant -1.400000e+00 : f32
    %94 = vector.broadcast %cst_31 : f32 to vector<8x1xf32>
    %95 = arith.mulf %94, %23 : vector<8x1xf32>
    %96 = arith.addf %95, %93 : vector<8x1xf32>
    %cst_32 = arith.constant 0.899999976 : f32
    %97 = vector.broadcast %cst_32 : f32 to vector<8x1xf32>
    %98 = arith.divf %96, %97 : vector<8x1xf32>
    %cst_33 = arith.constant 1.89469397 : f32
    %99 = vector.broadcast %cst_33 : f32 to vector<8x1xf32>
    %100 = arith.maximumf %98, %99 : vector<8x1xf32>
    %101 = arith.addf %23, %100 : vector<8x1xf32>
    %102 = arith.divf %101, %23 : vector<8x1xf32>
    %103 = math.log %102 : vector<8x1xf32>
    %104 = vector.shape_cast %63 : vector<8x1xf32> to vector<1x8x1xf32>
    %cst_34 = arith.constant dense<0.000000e+00> : vector<1xf32>
    %105 = vector.multi_reduction <add>, %104, %cst_34 [1, 2] : vector<1x8x1xf32> to vector<1xf32>
    %106 = vector.shape_cast %105 : vector<1xf32> to vector<1x1x1xf32>
    %107 = vector.extract %106[0, 0, 0] : f32 from vector<1x1x1xf32>
    %108 = vector.shape_cast %103 : vector<8x1xf32> to vector<1x8x1xf32>
    %cst_35 = arith.constant dense<0.000000e+00> : vector<1xf32>
    %109 = vector.multi_reduction <add>, %108, %cst_35 [1, 2] : vector<1x8x1xf32> to vector<1xf32>
    %110 = vector.shape_cast %109 : vector<1xf32> to vector<1x1x1xf32>
    %111 = vector.extract %110[0, 0, 0] : f32 from vector<1x1x1xf32>
    %112 = arith.addf %107, %111 : f32
    %c0_36 = arith.constant 0 : index
    %c0_37 = arith.constant 0 : index
    %113 = memref.load %arg3[%c0_36, %c0_37] : memref<1x1xf32, #tpu.memory_space<smem>>
    memref.store %112, %arg3[%c0_36, %c0_37] : memref<1x1xf32, #tpu.memory_space<smem>>
    return
  }
  func.func @transform_0(%arg0: i32) -> (i32, i32) {
    %c0_i32 = arith.constant 0 : i32
    %c0_i32_0 = arith.constant 0 : i32
    %c0_i32_1 = arith.constant 0 : i32
    return %c0_i32, %c0_i32_0 : i32, i32
  }
  func.func @transform_1(%arg0: i32) -> (i32, i32) {
    %c0_i32 = arith.constant 0 : i32
    %c0_i32_0 = arith.constant 0 : i32
    %c0_i32_1 = arith.constant 0 : i32
    return %c0_i32, %c0_i32_0 : i32, i32
  }
  func.func @transform_2(%arg0: i32) -> (i32, i32) {
    %c0_i32 = arith.constant 0 : i32
    %c0_i32_0 = arith.constant 0 : i32
    return %arg0, %c0_i32 : i32, i32
  }
}

</mosaic_0001>

<llo_original>
// kernel: tpu_custom_call.1
$region0: #{tpu_custom_call.1}
  #allocation0 [shape = 'u32[]', space=smem, size = 0x4, offset = 0x4, fixed_abs, tag = 'smem constant byte address 0x4 - core index']
  #allocation1 [shape = 'u32[144,128]{1,0:T(1,128)}', space=vmem, size = 0x12000, scoped, tag = 'internal scratch']
  %s0 = inlined_call_operand.hbm [shape: f32[8,32], index: 0, kind: input, shape index: {}]
  %s1 = inlined_call_operand.hbm [shape: f32[8,32], index: 1, kind: input, shape index: {}]
  %s2 = inlined_call_operand.hbm [shape: f32[1,1], index: 2, kind: output, shape index: {}]
  %s3 = sld [smem:[#allocation0]]
  $region26: #{tpu_custom_call.1} parent=0
    _
  %s5 = ssub.s32 1, %s3
  %s6 = scalar_select 0, %s5, %s3
  $region1: #{tpu_custom_call.1} parent=0
    #allocation2 [shape = 'u8[4096]{0}', space=vmem, size = 0x1000, scoped, tag = 'input window, operand 0, single buffered']
    #allocation3 [shape = 's32[1]{0}', space=sflag, size = 0x4, scoped, tag = 'scoped memory for tpu_custom_call.1']
    #allocation4 [shape = 's32[1]{0}', space=sflag, size = 0x4, scoped, tag = 'scoped memory for tpu_custom_call.1']
    #allocation5 [shape = 'u8[4096]{0}', space=vmem, size = 0x1000, scoped, tag = 'input window, operand 1, single buffered']
    #allocation6 [shape = 's32[1]{0}', space=sflag, size = 0x4, scoped, tag = 'scoped memory for tpu_custom_call.1']
    #allocation7 [shape = 'u8[512]{0}', space=smem, size = 0x200, scoped, tag = 'output window, operand 0, single buffered']
    %7 = vsyncpa [#allocation3], 0
    %8 = vsyncpa [#allocation6], 0
    %9 = vsyncpa [#allocation4], 0
    // Predicated region
    $region2: #{tpu_custom_call.1} parent=1 // pred_check
      _
    $region3: #{tpu_custom_call.1} parent=1 // pred_check_branch
      %11 = sbr.rel (0) target = $region5
    $region4: #{tpu_custom_call.1} parent=1 // pred_region
      %s13 = ssub.s32 128, 128
      %14 = vsyncadd [#allocation3], %s13
      %s16 = sshll.u32 [#allocation2], 4
      %s17 = int_to_ptr.vmem [resolvable:$true] %s16
      %19 = dma.hbm_to_vmem [thread:$0]  %s0, 128, %s17, [#allocation3]
    $region5: #{tpu_custom_call.1} parent=1 // pred_fallthru
      _
    // Predicated region
    $region6: #{tpu_custom_call.1} parent=1 // pred_check
      _
    $region7: #{tpu_custom_call.1} parent=1 // pred_check_branch
      %21 = sbr.rel (0) target = $region9
    $region8: #{tpu_custom_call.1} parent=1 // pred_region
      %s23 = ssub.s32 128, 128
      %24 = vsyncadd [#allocation6], %s23
      %s26 = sshll.u32 [#allocation5], 4
      %s27 = int_to_ptr.vmem [resolvable:$true] %s26
      %29 = dma.hbm_to_vmem [thread:$0]  %s1, 128, %s27, [#allocation6]
    $region9: #{tpu_custom_call.1} parent=1 // pred_fallthru
      _
    // Predicated region
    $region10: #{tpu_custom_call.1} parent=1 // pred_check
      _
    $region11: #{tpu_custom_call.1} parent=1 // pred_check_branch
      %31 = sbr.rel (0) target = $region13
    $region12: #{tpu_custom_call.1} parent=1 // pred_region
      %32 = dma.done [#allocation3], 128
    $region13: #{tpu_custom_call.1} parent=1 // pred_fallthru
      _
    // Predicated region
    $region14: #{tpu_custom_call.1} parent=1 // pred_check
      _
    $region15: #{tpu_custom_call.1} parent=1 // pred_check_branch
      %34 = sbr.rel (0) target = $region17
    $region16: #{tpu_custom_call.1} parent=1 // pred_region
      %35 = dma.done [#allocation6], 128
    $region17: #{tpu_custom_call.1} parent=1 // pred_fallthru
      _
    %v36 = vld [vmem:[#allocation2] sm:$0xff]
    %v37 = vld [vmem:[#allocation5] sm:$0xff]
    %s38 = smul.u32 0, 8
    %s39 = scalar_lea.vmem [#allocation2], %s38
    %v40 = vld [vmem:[%s39] sm:$0xff]
    %s41 = scalar_lea.vmem [#allocation5], %s38
    %v42 = vld [vmem:[%s41] sm:$0xff]
    %v43 = vmul.f32 %v40, %v42
    %vm44 = vcmask 261120
    %v45 = vsel %vm44, %v43, 0.0
    %46 = vadd.xlane.f32.xlu0 %v45
    %v47 = vpop.xlane.xlu0 %46
    %v48 = vmul.f32 %v47, 2.0
    %v49 = vmul.f32 %v40, %v40
    %v50 = vsel %vm44, %v49, 0.0
    %51 = vadd.xlane.f32.xlu0 %v50
    %v52 = vpop.xlane.xlu0 %51
    %v53 = vmul.f32 %v52, 2.0
    %v54 = vmul.f32 %v42, %v42
    %v55 = vsel %vm44, %v54, 0.0
    %56 = vadd.xlane.f32.xlu0 %v55
    %v57 = vpop.xlane.xlu0 %56
    %v58 = vmul.f32 %v57, 2.0
    %v59 = vmul.f32 %v48, 1.442695
    %v60 = vpow.pop %v59
    %v62 = vsel %vm44, %v40, 0
    %v65 = vsel %vm44, %v36, 0
    %67 = vmatprep.subr.mxu0 0.0
    %68 = vmatpush1.xpose.msra.mxu0 %v65
    %69 = vmatprep.subr.mxu0 0.0
    %70 = vmatpush1.xpose.msra.mxu0 0.0
    %71 = vmatprep.subr.mxu0 0.0
    %72 = vmatpush1.xpose.msra.mxu0 0.0
    %73 = vmatprep.subr.mxu0 0.0
    %74 = vmatpush1.xpose.msra.mxu0 0.0
    %75 = vmatprep.subr.mxu0 0.0
    %76 = vmatpush1.xpose.msra.mxu0 0.0
    %77 = vmatprep.subr.mxu0 0.0
    %78 = vmatpush1.xpose.msra.mxu0 0.0
    %79 = vmatprep.subr.mxu0 0.0
    %80 = vmatpush1.xpose.msra.mxu0 0.0
    %81 = vmatprep.subr.mxu0 0.0
    %82 = vmatpush1.xpose.msra.mxu0 0.0
    %83 = vmatprep.subr.mxu0 0.0
    %84 = vmatpush1.xpose.msra.mxu0 0.0
    %85 = vmatprep.subr.mxu0 0.0
    %86 = vmatpush1.xpose.msra.mxu0 0.0
    %87 = vmatprep.subr.mxu0 0.0
    %88 = vmatpush1.xpose.msra.mxu0 0.0
    %89 = vmatprep.subr.mxu0 0.0
    %90 = vmatpush1.xpose.msra.mxu0 0.0
    %91 = vmatprep.subr.mxu0 0.0
    %92 = vmatpush1.xpose.msra.mxu0 0.0
    %93 = vmatprep.subr.mxu0 0.0
    %94 = vmatpush1.xpose.msra.mxu0 0.0
    %95 = vmatprep.subr.mxu0 0.0
    %96 = vmatpush1.xpose.msra.mxu0 0.0
    %97 = vmatprep.subr.mxu0 0.0
    %98 = vmatpush1.xpose.msra.mxu0 0.0
    %99 = vmatprep.subr.mxu0 0.0
    %100 = vmatpush1.xpose.msra.mxu0 0.0
    %101 = vmatprep.subr.mxu0 0.0
    %102 = vmatpush1.xpose.msra.mxu0 0.0
    %103 = vmatprep.subr.mxu0 0.0
    %104 = vmatpush1.xpose.msra.mxu0 0.0
    %105 = vmatprep.subr.mxu0 0.0
    %106 = vmatpush1.xpose.msra.mxu0 0.0
    %107 = vmatprep.subr.mxu0 0.0
    %108 = vmatpush1.xpose.msra.mxu0 0.0
    %109 = vmatprep.subr.mxu0 0.0
    %110 = vmatpush1.xpose.msra.mxu0 0.0
    %111 = vmatprep.subr.mxu0 0.0
    %112 = vmatpush1.xpose.msra.mxu0 0.0
    %113 = vmatprep.subr.mxu0 0.0
    %114 = vmatpush1.xpose.msra.mxu0 0.0
    %115 = vmatprep.subr.mxu0 0.0
    %116 = vmatpush1.xpose.msra.mxu0 0.0
    %117 = vmatprep.subr.mxu0 0.0
    %118 = vmatpush1.xpose.msra.mxu0 0.0
    %119 = vmatprep.subr.mxu0 0.0
    %120 = vmatpush1.xpose.msra.mxu0 0.0
    %121 = vmatprep.subr.mxu0 0.0
    %122 = vmatpush1.xpose.msra.mxu0 0.0
    %123 = vmatprep.subr.mxu0 0.0
    %124 = vmatpush1.xpose.msra.mxu0 0.0
    %125 = vmatprep.subr.mxu0 0.0
    %126 = vmatpush1.xpose.msra.mxu0 0.0
    %127 = vmatprep.subr.mxu0 0.0
    %128 = vmatpush1.xpose.msra.mxu0 0.0
    %129 = vmatprep.subr.mxu0 0.0
    %130 = vmatpush1.xpose.msra.mxu0 0.0
    %131 = vmatprep.mubr.f32.mxu0 0.0
    %132 = vmatmul.mubr.f32.gmra.mrb[0].mxu0 %v62
    %v133 = vpop.f32.mrb[0].mxu0
    %v134 = vadd.f32 0.0, %v133
    %v135 = vpop.f32.mrb[0].mxu0
    %136 = vdwg.mxu0
    %v137 = vmul.f32 %v134, 2.0
    %v139 = vsel %vm44, %v37, 0
    %141 = vmatprep.subr.mxu0 0.0
    %142 = vmatpush1.xpose.msra.mxu0 %v139
    %143 = vmatprep.subr.mxu0 0.0
    %144 = vmatpush1.xpose.msra.mxu0 0.0
    %145 = vmatprep.subr.mxu0 0.0
    %146 = vmatpush1.xpose.msra.mxu0 0.0
    %147 = vmatprep.subr.mxu0 0.0
    %148 = vmatpush1.xpose.msra.mxu0 0.0
    %149 = vmatprep.subr.mxu0 0.0
    %150 = vmatpush1.xpose.msra.mxu0 0.0
    %151 = vmatprep.subr.mxu0 0.0
    %152 = vmatpush1.xpose.msra.mxu0 0.0
    %153 = vmatprep.subr.mxu0 0.0
    %154 = vmatpush1.xpose.msra.mxu0 0.0
    %155 = vmatprep.subr.mxu0 0.0
    %156 = vmatpush1.xpose.msra.mxu0 0.0
    %157 = vmatprep.subr.mxu0 0.0
    %158 = vmatpush1.xpose.msra.mxu0 0.0
    %159 = vmatprep.subr.mxu0 0.0
    %160 = vmatpush1.xpose.msra.mxu0 0.0
    %161 = vmatprep.subr.mxu0 0.0
    %162 = vmatpush1.xpose.msra.mxu0 0.0
    %163 = vmatprep.subr.mxu0 0.0
    %164 = vmatpush1.xpose.msra.mxu0 0.0
    %165 = vmatprep.subr.mxu0 0.0
    %166 = vmatpush1.xpose.msra.mxu0 0.0
    %167 = vmatprep.subr.mxu0 0.0
    %168 = vmatpush1.xpose.msra.mxu0 0.0
    %169 = vmatprep.subr.mxu0 0.0
    %170 = vmatpush1.xpose.msra.mxu0 0.0
    %171 = vmatprep.subr.mxu0 0.0
    %172 = vmatpush1.xpose.msra.mxu0 0.0
    %173 = vmatprep.subr.mxu0 0.0
    %174 = vmatpush1.xpose.msra.mxu0 0.0
    %175 = vmatprep.subr.mxu0 0.0
    %176 = vmatpush1.xpose.msra.mxu0 0.0
    %177 = vmatprep.subr.mxu0 0.0
    %178 = vmatpush1.xpose.msra.mxu0 0.0
    %179 = vmatprep.subr.mxu0 0.0
    %180 = vmatpush1.xpose.msra.mxu0 0.0
    %181 = vmatprep.subr.mxu0 0.0
    %182 = vmatpush1.xpose.msra.mxu0 0.0
    %183 = vmatprep.subr.mxu0 0.0
    %184 = vmatpush1.xpose.msra.mxu0 0.0
    %185 = vmatprep.subr.mxu0 0.0
    %186 = vmatpush1.xpose.msra.mxu0 0.0
    %187 = vmatprep.subr.mxu0 0.0
    %188 = vmatpush1.xpose.msra.mxu0 0.0
    %189 = vmatprep.subr.mxu0 0.0
    %190 = vmatpush1.xpose.msra.mxu0 0.0
    %191 = vmatprep.subr.mxu0 0.0
    %192 = vmatpush1.xpose.msra.mxu0 0.0
    %193 = vmatprep.subr.mxu0 0.0
    %194 = vmatpush1.xpose.msra.mxu0 0.0
    %195 = vmatprep.subr.mxu0 0.0
    %196 = vmatpush1.xpose.msra.mxu0 0.0
    %197 = vmatprep.subr.mxu0 0.0
    %198 = vmatpush1.xpose.msra.mxu0 0.0
    %199 = vmatprep.subr.mxu0 0.0
    %200 = vmatpush1.xpose.msra.mxu0 0.0
    %201 = vmatprep.subr.mxu0 0.0
    %202 = vmatpush1.xpose.msra.mxu0 0.0
    %203 = vmatprep.subr.mxu0 0.0
    %204 = vmatpush1.xpose.msra.mxu0 0.0
    %205 = vmatprep.mubr.f32.mxu0 0.0
    %206 = vmatmul.mubr.f32.gmra.mrb[0].mxu0 %v62
    %v207 = vpop.f32.mrb[0].mxu0
    %v208 = vadd.f32 0.0, %v207
    %v209 = vpop.f32.mrb[0].mxu0
    %210 = vdwg.mxu0
    %v211 = vmul.f32 %v208, 2.0
    %v212 = vmul.f32 %v137, 1.442695
    %v213 = vpow.pop %v212
    %v214 = vmul.f32 %v211, 1.442695
    %v215 = vpow.pop %v214
    %vm216 = vcmask 64512
    %v217 = vsel %vm216, %v213, 0.0
    %218 = vadd.xlane.f32.xlu0 %v217
    %v219 = vpop.xlane.xlu0 %218
    %v220 = vsel %vm216, %v215, 0.0
    %221 = vadd.xlane.f32.xlu0 %v220
    %v222 = vpop.xlane.xlu0 %221
    %v223 = vadd.f32 %v219, %v222
    %v224 = vmul.f32 %v213, %v213
    %v225 = vsel %vm216, %v224, 0.0
    %226 = vadd.xlane.f32.xlu0 %v225
    %v227 = vpop.xlane.xlu0 %226
    %v228 = vmul.f32 %v215, %v215
    %v229 = vsel %vm216, %v228, 0.0
    %230 = vadd.xlane.f32.xlu0 %v229
    %v231 = vpop.xlane.xlu0 %230
    %v232 = vadd.f32 %v227, %v231
    %v233 = vmul.f32 %v53, 1.442695
    %v234 = vpow.pop %v233
    %v235 = vsub.f32 %v223, %v234
    %v236 = vsub.f32 %v235, %v60
    %v237 = vmul.f32 %v234, %v234
    %v238 = vsub.f32 %v232, %v237
    %v239 = vmul.f32 %v60, %v60
    %v240 = vsub.f32 %v238, %v239
    %v241 = vmul.f32 %v240, 14.0
    %v242 = vrcp.pop %v236
    %v243 = vmul.f32 %v241, %v242
    %v244 = vmul.f32 %v60, -1.4
    %v245 = vadd.f32 %v244, %v243
    %v246 = vrcp.pop 0.9
    %v247 = vmul.f32 %v245, %v246
    %v248 = vmax.f32 %v247, 1.894694
    %v249 = vadd.f32 %v60, %v248
    %v250 = vrcp.pop %v60
    %v251 = vmul.f32 %v249, %v250
    %v252 = vlog2.pop %v251
    %v253 = vmul.f32 %v252, 0.6931472
    %v255 = vsel %vm44, %v42, 0
    %257 = vmatprep.subr.mxu0 0.0
    %258 = vmatpush1.xpose.msra.mxu0 %v65
    %259 = vmatprep.subr.mxu0 0.0
    %260 = vmatpush1.xpose.msra.mxu0 0.0
    %261 = vmatprep.subr.mxu0 0.0
    %262 = vmatpush1.xpose.msra.mxu0 0.0
    %263 = vmatprep.subr.mxu0 0.0
    %264 = vmatpush1.xpose.msra.mxu0 0.0
    %265 = vmatprep.subr.mxu0 0.0
    %266 = vmatpush1.xpose.msra.mxu0 0.0
    %267 = vmatprep.subr.mxu0 0.0
    %268 = vmatpush1.xpose.msra.mxu0 0.0
    %269 = vmatprep.subr.mxu0 0.0
    %270 = vmatpush1.xpose.msra.mxu0 0.0
    %271 = vmatprep.subr.mxu0 0.0
    %272 = vmatpush1.xpose.msra.mxu0 0.0
    %273 = vmatprep.subr.mxu0 0.0
    %274 = vmatpush1.xpose.msra.mxu0 0.0
    %275 = vmatprep.subr.mxu0 0.0
    %276 = vmatpush1.xpose.msra.mxu0 0.0
    %277 = vmatprep.subr.mxu0 0.0
    %278 = vmatpush1.xpose.msra.mxu0 0.0
    %279 = vmatprep.subr.mxu0 0.0
    %280 = vmatpush1.xpose.msra.mxu0 0.0
    %281 = vmatprep.subr.mxu0 0.0
    %282 = vmatpush1.xpose.msra.mxu0 0.0
    %283 = vmatprep.subr.mxu0 0.0
    %284 = vmatpush1.xpose.msra.mxu0 0.0
    %285 = vmatprep.subr.mxu0 0.0
    %286 = vmatpush1.xpose.msra.mxu0 0.0
    %287 = vmatprep.subr.mxu0 0.0
    %288 = vmatpush1.xpose.msra.mxu0 0.0
    %289 = vmatprep.subr.mxu0 0.0
    %290 = vmatpush1.xpose.msra.mxu0 0.0
    %291 = vmatprep.subr.mxu0 0.0
    %292 = vmatpush1.xpose.msra.mxu0 0.0
    %293 = vmatprep.subr.mxu0 0.0
    %294 = vmatpush1.xpose.msra.mxu0 0.0
    %295 = vmatprep.subr.mxu0 0.0
    %296 = vmatpush1.xpose.msra.mxu0 0.0
    %297 = vmatprep.subr.mxu0 0.0
    %298 = vmatpush1.xpose.msra.mxu0 0.0
    %299 = vmatprep.subr.mxu0 0.0
    %300 = vmatpush1.xpose.msra.mxu0 0.0
    %301 = vmatprep.subr.mxu0 0.0
    %302 = vmatpush1.xpose.msra.mxu0 0.0
    %303 = vmatprep.subr.mxu0 0.0
    %304 = vmatpush1.xpose.msra.mxu0 0.0
    %305 = vmatprep.subr.mxu0 0.0
    %306 = vmatpush1.xpose.msra.mxu0 0.0
    %307 = vmatprep.subr.mxu0 0.0
    %308 = vmatpush1.xpose.msra.mxu0 0.0
    %309 = vmatprep.subr.mxu0 0.0
    %310 = vmatpush1.xpose.msra.mxu0 0.0
    %311 = vmatprep.subr.mxu0 0.0
    %312 = vmatpush1.xpose.msra.mxu0 0.0
    %313 = vmatprep.subr.mxu0 0.0
    %314 = vmatpush1.xpose.msra.mxu0 0.0
    %315 = vmatprep.subr.mxu0 0.0
    %316 = vmatpush1.xpose.msra.mxu0 0.0
    %317 = vmatprep.subr.mxu0 0.0
    %318 = vmatpush1.xpose.msra.mxu0 0.0
    %319 = vmatprep.subr.mxu0 0.0
    %320 = vmatpush1.xpose.msra.mxu0 0.0
    %321 = vmatprep.mubr.f32.mxu0 0.0
    %322 = vmatmul.mubr.f32.gmra.mrb[0].mxu0 %v255
    %v323 = vpop.f32.mrb[0].mxu0
    %v324 = vadd.f32 0.0, %v323
    %v325 = vpop.f32.mrb[0].mxu0
    %326 = vdwg.mxu0
    %v327 = vmul.f32 %v324, 2.0
    %328 = vmatprep.subr.mxu0 0.0
    %329 = vmatpush1.xpose.msra.mxu0 %v139
    %330 = vmatprep.subr.mxu0 0.0
    %331 = vmatpush1.xpose.msra.mxu0 0.0
    %332 = vmatprep.subr.mxu0 0.0
    %333 = vmatpush1.xpose.msra.mxu0 0.0
    %334 = vmatprep.subr.mxu0 0.0
    %335 = vmatpush1.xpose.msra.mxu0 0.0
    %336 = vmatprep.subr.mxu0 0.0
    %337 = vmatpush1.xpose.msra.mxu0 0.0
    %338 = vmatprep.subr.mxu0 0.0
    %339 = vmatpush1.xpose.msra.mxu0 0.0
    %340 = vmatprep.subr.mxu0 0.0
    %341 = vmatpush1.xpose.msra.mxu0 0.0
    %342 = vmatprep.subr.mxu0 0.0
    %343 = vmatpush1.xpose.msra.mxu0 0.0
    %344 = vmatprep.subr.mxu0 0.0
    %345 = vmatpush1.xpose.msra.mxu0 0.0
    %346 = vmatprep.subr.mxu0 0.0
    %347 = vmatpush1.xpose.msra.mxu0 0.0
    %348 = vmatprep.subr.mxu0 0.0
    %349 = vmatpush1.xpose.msra.mxu0 0.0
    %350 = vmatprep.subr.mxu0 0.0
    %351 = vmatpush1.xpose.msra.mxu0 0.0
    %352 = vmatprep.subr.mxu0 0.0
    %353 = vmatpush1.xpose.msra.mxu0 0.0
    %354 = vmatprep.subr.mxu0 0.0
    %355 = vmatpush1.xpose.msra.mxu0 0.0
    %356 = vmatprep.subr.mxu0 0.0
    %357 = vmatpush1.xpose.msra.mxu0 0.0
    %358 = vmatprep.subr.mxu0 0.0
    %359 = vmatpush1.xpose.msra.mxu0 0.0
    %360 = vmatprep.subr.mxu0 0.0
    %361 = vmatpush1.xpose.msra.mxu0 0.0
    %362 = vmatprep.subr.mxu0 0.0
    %363 = vmatpush1.xpose.msra.mxu0 0.0
    %364 = vmatprep.subr.mxu0 0.0
    %365 = vmatpush1.xpose.msra.mxu0 0.0
    %366 = vmatprep.subr.mxu0 0.0
    %367 = vmatpush1.xpose.msra.mxu0 0.0
    %368 = vmatprep.subr.mxu0 0.0
    %369 = vmatpush1.xpose.msra.mxu0 0.0
    %370 = vmatprep.subr.mxu0 0.0
    %371 = vmatpush1.xpose.msra.mxu0 0.0
    %372 = vmatprep.subr.mxu0 0.0
    %373 = vmatpush1.xpose.msra.mxu0 0.0
    %374 = vmatprep.subr.mxu0 0.0
    %375 = vmatpush1.xpose.msra.mxu0 0.0
    %376 = vmatprep.subr.mxu0 0.0
    %377 = vmatpush1.xpose.msra.mxu0 0.0
    %378 = vmatprep.subr.mxu0 0.0
    %379 = vmatpush1.xpose.msra.mxu0 0.0
    %380 = vmatprep.subr.mxu0 0.0
    %381 = vmatpush1.xpose.msra.mxu0 0.0
    %382 = vmatprep.subr.mxu0 0.0
    %383 = vmatpush1.xpose.msra.mxu0 0.0
    %384 = vmatprep.subr.mxu0 0.0
    %385 = vmatpush1.xpose.msra.mxu0 0.0
    %386 = vmatprep.subr.mxu0 0.0
    %387 = vmatpush1.xpose.msra.mxu0 0.0
    %388 = vmatprep.subr.mxu0 0.0
    %389 = vmatpush1.xpose.msra.mxu0 0.0
    %390 = vmatprep.subr.mxu0 0.0
    %391 = vmatpush1.xpose.msra.mxu0 0.0
    %392 = vmatprep.mubr.f32.mxu0 0.0
    %393 = vmatmul.mubr.f32.gmra.mrb[0].mxu0 %v255
    %v394 = vpop.f32.mrb[0].mxu0
    %v395 = vadd.f32 0.0, %v394
    %v396 = vpop.f32.mrb[0].mxu0
    %397 = vdwg.mxu0
    %v398 = vmul.f32 %v395, 2.0
    %v399 = vmul.f32 %v327, 1.442695
    %v400 = vpow.pop %v399
    %v401 = vmul.f32 %v398, 1.442695
    %v402 = vpow.pop %v401
    %v403 = vsel %vm216, %v400, 0.0
    %404 = vadd.xlane.f32.xlu0 %v403
    %v405 = vpop.xlane.xlu0 %404
    %v406 = vsel %vm216, %v402, 0.0
    %407 = vadd.xlane.f32.xlu0 %v406
    %v408 = vpop.xlane.xlu0 %407
    %v409 = vadd.f32 %v405, %v408
    %v410 = vmul.f32 %v400, %v400
    %v411 = vsel %vm216, %v410, 0.0
    %412 = vadd.xlane.f32.xlu0 %v411
    %v413 = vpop.xlane.xlu0 %412
    %v414 = vmul.f32 %v402, %v402
    %v415 = vsel %vm216, %v414, 0.0
    %416 = vadd.xlane.f32.xlu0 %v415
    %v417 = vpop.xlane.xlu0 %416
    %v418 = vadd.f32 %v413, %v417
    %v419 = vmul.f32 %v58, 1.442695
    %v420 = vpow.pop %v419
    %v421 = vsub.f32 %v409, %v420
    %v422 = vsub.f32 %v421, %v60
    %v423 = vmul.f32 %v420, %v420
    %v424 = vsub.f32 %v418, %v423
    %v425 = vsub.f32 %v424, %v239
    %v426 = vmul.f32 %v425, 14.0
    %v427 = vrcp.pop %v422
    %v428 = vmul.f32 %v426, %v427
    %v429 = vadd.f32 %v244, %v428
    %v430 = vmul.f32 %v429, %v246
    %v431 = vmax.f32 %v430, 1.894694
    %v432 = vadd.f32 %v60, %v431
    %v433 = vmul.f32 %v432, %v250
    %v434 = vlog2.pop %v433
    %v435 = vmul.f32 %v434, 0.6931472
    %vm436 = vcmask 7168
    %v437 = vsel %vm436, %v253, 0.0
    %438 = vadd.xlane.f32.xlu0 %v437
    %v439 = vpop.xlane.xlu0 %438
    %v440 = vrot.slane %v439, 4
    %v441 = vadd.f32 %v439, %v440
    %v442 = vrot.slane %v441, 2
    %v443 = vadd.f32 %v441, %v442
    %v444 = vrot.slane %v443, 1
    %v445 = vadd.f32 %v443, %v444
    %s446 = vtos %v445
    %v447 = vsel %vm436, %v435, 0.0
    %448 = vadd.xlane.f32.xlu0 %v447
    %v449 = vpop.xlane.xlu0 %448
    %v450 = vrot.slane %v449, 4
    %v451 = vadd.f32 %v449, %v450
    %v452 = vrot.slane %v451, 2
    %v453 = vadd.f32 %v451, %v452
    %v454 = vrot.slane %v453, 1
    %v455 = vadd.f32 %v453, %v454
    %s456 = vtos %v455
    %s457 = sadd.f32 %s446, %s456
    %s458 = scalar_lea.smem [#allocation7], 0
    %459 = sst [smem:[%s458]] %s457
    // Predicated region
    $region18: #{tpu_custom_call.1} parent=1 // pred_check
      _
    $region19: #{tpu_custom_call.1} parent=1 // pred_check_branch
      %461 = sbr.rel (0) target = $region21
    $region20: #{tpu_custom_call.1} parent=1 // pred_region
      %s463 = ssub.s32 16, 16
      %464 = vsyncadd [#allocation4], %s463
      %467 = dma.smem_to_hbm [#allocation7], 16, %s2, [#allocation4]
    $region21: #{tpu_custom_call.1} parent=1 // pred_fallthru
      _
    // Predicated region
    $region22: #{tpu_custom_call.1} parent=1 // pred_check
      _
    $region23: #{tpu_custom_call.1} parent=1 // pred_check_branch
      %469 = sbr.rel (0) target = $region25
    $region24: #{tpu_custom_call.1} parent=1 // pred_region
      %470 = dma.done [#allocation4], 16
    $region25: #{tpu_custom_call.1} parent=1 // pred_fallthru
      _
    %471 = sfence
    %472 = vsyncpa [#allocation3], 1
    %473 = vsyncpa [#allocation6], 1
    %474 = vsyncpa [#allocation4], 1

</llo_original>
